<compile_context>
chip_gen: v5e
topology: v5e:2x2
jax: 0.10.0
libtpu: 0.0.40
codegen_flags: <defaults>
</compile_context>

<pallas_src>
import jax
import jax.numpy as jnp
from jax.experimental import pallas as pl
from jax.experimental.pallas import tpu as pltpu

# ---- model dims (from the PyTorch module) ----
TIME_SERIES_INPUT_DIM = 3
HIDDEN_DIM = 64
IMAGE_OUTPUT_DIM = 128        # latent dim of the time-series autoencoder
EFFICIENTNET_FEAT_DIM = 1280  # EfficientNet-b0 pooled feature size
OUTPUT_DIM = 3

LANE = 128                    # lane-dense width for the combined output slab


# --------------------------------------------------------------------------
# Small helpers
# --------------------------------------------------------------------------
def _round_up(x, m):
    return (x + m - 1) // m * m


def _pad_cols(a, n):
    return jnp.pad(a, ((0, 0), (0, n - a.shape[1])))


def _pad_batch(a, bp):
    if a.shape[0] == bp:
        return a
    return jnp.pad(a, ((0, bp - a.shape[0]),) + ((0, 0),) * (a.ndim - 1))


def _rep_spec(shape):
    # weight/bias: full-array block, same block every grid step (VMEM-resident)
    zero = (0,) * len(shape)
    return pl.BlockSpec(shape, lambda i, _z=zero: _z)


def _device_kind():
    try:
        return jax.devices()[0].device_kind.lower()
    except Exception:
        return ""


def _max_tb():
    # v5e: 1024; v6e/v7x: 2048.  Double-buffered tiles stay ~8-20 MiB, well
    # under physical VMEM (64 MiB v7x, 128 MiB v5e/v6e).
    return 1024 if "v5" in _device_kind() else 2048


def _is_v7x():
    return "v7" in _device_kind()


def _batch_tile(batch):
    cap = _max_tb()
    b16 = _round_up(batch, 16)           # bf16 native sublane tile is 16
    steps = max(1, pl.cdiv(b16, cap))
    if _is_v7x():
        # keep >=2 grid steps when the batch allows it: batch is the only
        # "parallel" axis, and v7x has 2 TensorCores per chip.
        steps = max(steps, min(2, b16 // 16))
    tb = _round_up(pl.cdiv(batch, steps), 16)
    bp = steps * tb
    return tb, bp


def _vmem_bytes(shape, dtype):
    # Conservative VMEM footprint of one buffer (trailing dims rounded to the
    # native tile; good enough to size vmem_limit_bytes with headroom).
    itemsize = jnp.dtype(dtype).itemsize
    if len(shape) == 1:
        shape = (1,) + tuple(shape)
    lead = 1
    for d in shape[:-2]:
        lead *= d
    return lead * _round_up(shape[-2], 16) * _round_up(shape[-1], LANE) * itemsize


# --------------------------------------------------------------------------
# Kernel bodies
# --------------------------------------------------------------------------
def _encode_decode(x, we1, be1, we2, be2, wd1, bd1):
    # encoder entry Linear(3 -> 64): K=3 -> VPU broadcast MACs (keep MXU free)
    h = be1
    for k in range(TIME_SERIES_INPUT_DIM):
        h = h + x[:, k:k + 1] * we1[k:k + 1, :]
    h = jnp.maximum(h, 0.0)                                                    # (TB, 64)
    latent = jnp.dot(h, we2, preferred_element_type=jnp.float32) + be2         # (TB, 128)
    h2 = jnp.maximum(
        jnp.dot(latent, wd1, preferred_element_type=jnp.float32) + bd1, 0.0)   # (TB, 64)
    return latent, h2


def fused_kernel(ts_ref, img_ref,
                 we1_ref, be1_ref, we2_ref, be2_ref, wd1_ref, bd1_ref,
                 w1ts_ref, w1img_ref, b1_ref, wexit_ref, bexit_ref,
                 out_ref):
    latent, h2 = _encode_decode(
        ts_ref[...], we1_ref[...], be1_ref[...], we2_ref[...], be2_ref[...],
        wd1_ref[...], bd1_ref[...])

    # fusion head: concat(latent_ts, latent_img) @ W1 == latent@W1[:128] + img@W1[128:]
    # Both branches run bf16 on the MXU (image stream is bf16 anyway), f32 accumulation.
    hh = (jnp.dot(latent.astype(jnp.bfloat16), w1ts_ref[...],
                  preferred_element_type=jnp.float32)
          + jnp.dot(img_ref[...], w1img_ref[...],
                    preferred_element_type=jnp.float32)
          + b1_ref[...])
    hh = jnp.maximum(hh, 0.0)                                                  # (TB, 64)
    # Dropout(p=0.5) -> identity at inference time.

    # Combined exit: out (cols 0..63) and reconstruction (cols 64..127) in one
    # lane-dense (TB, 128) slab via a single (128, 128) block-diagonal matmul.
    hcat = jnp.concatenate([hh, h2], axis=-1)                                  # (TB, 128)
    out_ref[...] = (jnp.dot(hcat, wexit_ref[...],
                            preferred_element_type=jnp.float32) + bexit_ref[...])


def ae_kernel(ts_ref,
              we1_ref, be1_ref, we2_ref, be2_ref, wd1_ref, bd1_ref,
              wd2p_ref, bd2p_ref,
              latent_ref, recon_ref):
    latent, h2 = _encode_decode(
        ts_ref[...], we1_ref[...], be1_ref[...], we2_ref[...], be2_ref[...],
        wd1_ref[...], bd1_ref[...])
    latent_ref[...] = latent
    # decoder exit padded to 128 lanes -> lane-dense store; real recon in cols [0:3]
    recon_ref[...] = (jnp.dot(h2, wd2p_ref[...],
                              preferred_element_type=jnp.float32) + bd2p_ref[...])


# --------------------------------------------------------------------------
# pallas_call wrappers
# --------------------------------------------------------------------------
_AE_WEIGHT_NAMES = ("we1", "be1", "we2", "be2", "wd1", "bd1", "wd2p", "bd2p")
_FUSED_WEIGHT_NAMES = ("we1", "be1", "we2", "be2", "wd1", "bd1",
                       "w1_ts_bf16", "w1_img_bf16", "b1", "wexitp", "bexitp")


def run_fused(time_series, image_features, kparams):
    B = time_series.shape[0]
    TB, Bp = _batch_tile(B)
    ts = _pad_batch(time_series.astype(jnp.float32), Bp)
    img = _pad_batch(image_features.astype(jnp.bfloat16), Bp)   # bf16 image stream
    weights = [kparams[n] for n in _FUSED_WEIGHT_NAMES]

    flops = 2 * Bp * (TIME_SERIES_INPUT_DIM * HIDDEN_DIM          # encoder entry
                      + HIDDEN_DIM * IMAGE_OUTPUT_DIM             # encoder exit
                      + IMAGE_OUTPUT_DIM * HIDDEN_DIM             # decoder entry
                      + 2 * HIDDEN_DIM * LANE                     # combined 128x128 exit
                      + IMAGE_OUTPUT_DIM * HIDDEN_DIM             # head ts branch
                      + EFFICIENTNET_FEAT_DIM * HIDDEN_DIM)       # head img branch
    bytes_accessed = (int(ts.size) * 4 + int(img.size) * 2 + Bp * LANE * 4
                      + sum(int(w.size) * w.dtype.itemsize for w in weights))

    tile_bytes = (_vmem_bytes((TB, TIME_SERIES_INPUT_DIM), jnp.float32)
                  + _vmem_bytes((TB, EFFICIENTNET_FEAT_DIM), jnp.bfloat16)
                  + _vmem_bytes((TB, LANE), jnp.float32))
    weight_bytes = sum(_vmem_bytes(w.shape, w.dtype) for w in weights)
    vmem_limit = 2 * (tile_bytes + weight_bytes) + (4 << 20)      # double-buffer + headroom

    slab = pl.pallas_call(
        fused_kernel,
        out_shape=jax.ShapeDtypeStruct((Bp, LANE), jnp.float32),
        grid_spec=pltpu.PrefetchScalarGridSpec(
            num_scalar_prefetch=0,
            grid=(Bp // TB,),
            in_specs=[pl.BlockSpec((TB, TIME_SERIES_INPUT_DIM), lambda i: (i, 0)),
                      pl.BlockSpec((TB, EFFICIENTNET_FEAT_DIM), lambda i: (i, 0))]
                     + [_rep_spec(w.shape) for w in weights],
            out_specs=pl.BlockSpec((TB, LANE), lambda i: (i, 0)),
        ),
        compiler_params=pltpu.CompilerParams(
            dimension_semantics=("parallel",),
            vmem_limit_bytes=int(vmem_limit)),
        cost_estimate=pl.CostEstimate(flops=flops, transcendentals=0,
                                      bytes_accessed=bytes_accessed),
    )(ts, img, *weights)
    output = slab[:B, :OUTPUT_DIM]
    recon = slab[:B, HIDDEN_DIM:HIDDEN_DIM + TIME_SERIES_INPUT_DIM]
    return output, recon


def run_autoencoder(time_series, kparams):
    B = time_series.shape[0]
    TB, Bp = _batch_tile(B)
    ts = _pad_batch(time_series.astype(jnp.float32), Bp)
    weights = [kparams[n] for n in _AE_WEIGHT_NAMES]

    tile_bytes = (_vmem_bytes((TB, TIME_SERIES_INPUT_DIM), jnp.float32)
                  + _vmem_bytes((TB, IMAGE_OUTPUT_DIM), jnp.float32)
                  + _vmem_bytes((TB, LANE), jnp.float32))
    weight_bytes = sum(_vmem_bytes(w.shape, w.dtype) for w in weights)
    vmem_limit = 2 * (tile_bytes + weight_bytes) + (4 << 20)

    latent_pad, recon_pad = pl.pallas_call(
        ae_kernel,
        out_shape=(jax.ShapeDtypeStruct((Bp, IMAGE_OUTPUT_DIM), jnp.float32),
                   jax.ShapeDtypeStruct((Bp, LANE), jnp.float32)),
        grid_spec=pltpu.PrefetchScalarGridSpec(
            num_scalar_prefetch=0,
            grid=(Bp // TB,),
            in_specs=[pl.BlockSpec((TB, TIME_SERIES_INPUT_DIM), lambda i: (i, 0))]
                     + [_rep_spec(w.shape) for w in weights],
            out_specs=(pl.BlockSpec((TB, IMAGE_OUTPUT_DIM), lambda i: (i, 0)),
                       pl.BlockSpec((TB, LANE), lambda i: (i, 0))),
        ),
        compiler_params=pltpu.CompilerParams(
            dimension_semantics=("parallel",),
            vmem_limit_bytes=int(vmem_limit)),
    )(ts, *weights)
    return latent_pad[:B], recon_pad[:B, :TIME_SERIES_INPUT_DIM]


def fusion_model_forward(time_series, kparams, image_features=None):
    """Mirrors FusionModel.forward.

    image_features stands in for EfficientNet(image) flattened to (B, 1280).
    """
    if image_features is not None:
        output, reconstructed_ts = run_fused(time_series, image_features, kparams)
        latent_image = image_features                 # (B, 1280), already flat
        return output, reconstructed_ts, latent_image
    latent_ts, reconstructed_ts = run_autoencoder(time_series, kparams)
    return latent_ts, reconstructed_ts


# --------------------------------------------------------------------------
# Deterministic parameter init (synthetic weights, not a checkpoint)
# --------------------------------------------------------------------------
def init_params(key):
    def linear(key, fan_in, fan_out):
        kw, kb = jax.random.split(key)
        scale = 1.0 / jnp.sqrt(jnp.float32(fan_in))
        w = jax.random.uniform(kw, (fan_in, fan_out), jnp.float32, -scale, scale)
        b = jax.random.uniform(kb, (1, fan_out), jnp.float32, -scale, scale)
        return w, b

    keys = jax.random.split(key, 7)
    we1, be1 = linear(keys[0], TIME_SERIES_INPUT_DIM, HIDDEN_DIM)
    we2, be2 = linear(keys[1], HIDDEN_DIM, IMAGE_OUTPUT_DIM)
    wd1, bd1 = linear(keys[2], IMAGE_OUTPUT_DIM, HIDDEN_DIM)
    wd2, bd2 = linear(keys[3], HIDDEN_DIM, TIME_SERIES_INPUT_DIM)
    # fc: Linear(128 + 1280, 64) split row-wise (concat folded in), then Linear(64, 3)
    w1_full, b1 = linear(keys[4], IMAGE_OUTPUT_DIM + EFFICIENTNET_FEAT_DIM, HIDDEN_DIM)
    w1_ts = w1_full[:IMAGE_OUTPUT_DIM]
    w1_img = w1_full[IMAGE_OUTPUT_DIM:]
    w2, b2 = linear(keys[5], HIDDEN_DIM, OUTPUT_DIM)
    return {
        "we1": we1, "be1": be1, "we2": we2, "be2": be2,
        "wd1": wd1, "bd1": bd1, "wd2": wd2, "bd2": bd2,
        "w1_ts": w1_ts, "w1_img": w1_img, "b1": b1,
        "w2": w2, "b2": b2,
    }


def prepare_kernel_params(params):
    """Kernel-ready params: combined lane-dense exit weights, bf16 head weights."""
    kp = dict(params)
    # AE-only path: decoder exit padded to 128 lanes (lane-dense recon store)
    kp["wd2p"] = _pad_cols(params["wd2"], LANE)                    # (64, 128)
    kp["bd2p"] = _pad_cols(params["bd2"], LANE)                    # (1, 128)
    # Fused path: single block-diagonal exit so out + recon share one output slab
    w2p64 = _pad_cols(params["w2"], HIDDEN_DIM)                    # (64, 64)
    wd2p64 = _pad_cols(params["wd2"], HIDDEN_DIM)                  # (64, 64)
    z = jnp.zeros((HIDDEN_DIM, HIDDEN_DIM), jnp.float32)
    kp["wexitp"] = jnp.block([[w2p64, z], [z, wd2p64]])            # (128, 128)
    kp["bexitp"] = jnp.concatenate(
        [_pad_cols(params["b2"], HIDDEN_DIM),
         _pad_cols(params["bd2"], HIDDEN_DIM)], axis=1)            # (1, 128)
    # Fusion-head weights held in bf16 (image branch is the heavy operand)
    kp["w1_ts_bf16"] = params["w1_ts"].astype(jnp.bfloat16)
    kp["w1_img_bf16"] = params["w1_img"].astype(jnp.bfloat16)
    return kp


# --------------------------------------------------------------------------
# Reference (plain JAX) for a sanity check
# --------------------------------------------------------------------------
def reference_forward(time_series, params, image_features, bf16_head=False):
    h = jnp.maximum(time_series @ params["we1"] + params["be1"], 0.0)
    latent = h @ params["we2"] + params["be2"]
    h2 = jnp.maximum(latent @ params["wd1"] + params["bd1"], 0.0)
    recon = h2 @ params["wd2"] + params["bd2"]

    def cast(a):
        return a.astype(jnp.bfloat16).astype(jnp.float32) if bf16_head else a

    hh = jnp.maximum(cast(latent) @ cast(params["w1_ts"])
                     + cast(image_features) @ cast(params["w1_img"])
                     + params["b1"], 0.0)
    out = hh @ params["w2"] + params["b2"]
    return out, recon, latent


if __name__ == "__main__":
    key = jax.random.PRNGKey(0)
    k_par, k_ts, k_img = jax.random.split(key, 3)

    params = init_params(k_par)
    kparams = prepare_kernel_params(params)

    B = 8
    time_series = jax.random.normal(k_ts, (B, TIME_SERIES_INPUT_DIM), jnp.float32)
    # Synthetic stand-in for EfficientNet-b0 pooled features (see TODO above).
    image_features = jax.random.normal(k_img, (B, EFFICIENTNET_FEAT_DIM), jnp.float32)

    # Path 1: image branch -> (output, reconstructed_time_series, latent_image)
    output, recon, latent_img = fusion_model_forward(
        time_series, kparams, image_features=image_features)
    # Path 2: time-series only -> (latent_time_series, reconstructed_time_series)
    latent_ts_only, recon_only = fusion_model_forward(time_series, kparams)

    jax.block_until_ready((output, recon, latent_img, latent_ts_only, recon_only))

    # Strict check vs a reference that mimics the kernel's bf16 fusion head.
    ref_out_bf, ref_recon, ref_latent = reference_forward(
        time_series, params, image_features, bf16_head=True)
    assert jnp.allclose(output, ref_out_bf, atol=2e-3, rtol=2e-3)
    assert jnp.allclose(recon, ref_recon, atol=1e-3, rtol=1e-3)
    assert jnp.allclose(recon_only, ref_recon, atol=1e-3, rtol=1e-3)
    assert jnp.allclose(latent_ts_only, ref_latent, atol=1e-3, rtol=1e-3)

    # Loose check vs the pure-f32 reference (bf16 image stream ~1e-3 abs error).
    ref_out_f32, _, _ = reference_forward(time_series, params, image_features)
    assert jnp.allclose(output, ref_out_f32, atol=5e-2, rtol=5e-2)

    assert output.shape == (B, OUTPUT_DIM)
    assert recon.shape == (B, TIME_SERIES_INPUT_DIM)
    assert latent_img.shape == (B, EFFICIENTNET_FEAT_DIM)

    print("KERNEL_OK")
</pallas_src>

<mosaic_0001>
module attributes {stable_mosaic.version = 11 : i64} {
  func.func @fused_kernel(%arg0: i32, %arg1: memref<16x3xf32, #tpu.memory_space<vmem>>, %arg2: memref<16x1280xbf16, #tpu.memory_space<vmem>>, %arg3: memref<3x64xf32, #tpu.memory_space<vmem>>, %arg4: memref<1x64xf32, #tpu.memory_space<vmem>>, %arg5: memref<64x128xf32, #tpu.memory_space<vmem>>, %arg6: memref<1x128xf32, #tpu.memory_space<vmem>>, %arg7: memref<128x64xf32, #tpu.memory_space<vmem>>, %arg8: memref<1x64xf32, #tpu.memory_space<vmem>>, %arg9: memref<128x64xbf16, #tpu.memory_space<vmem>>, %arg10: memref<1280x64xbf16, #tpu.memory_space<vmem>>, %arg11: memref<1x64xf32, #tpu.memory_space<vmem>>, %arg12: memref<128x128xf32, #tpu.memory_space<vmem>>, %arg13: memref<1x128xf32, #tpu.memory_space<vmem>>, %arg14: memref<16x128xf32, #tpu.memory_space<vmem>>) attributes {dimension_semantics = [#tpu.dimension_semantics<parallel>], iteration_bounds = array<i64: 1>, scalar_prefetch = 0 : i64, scratch_operands = 0 : i64, tpu.core_type = #tpu.core_type<tc>, window_params = [{transform_indices = @transform_0, window_bounds = array<i64: 16, 3>}, {transform_indices = @transform_1, window_bounds = array<i64: 16, 1280>}, {pipeline_mode = #tpu.pipeline_mode<synchronous>, transform_indices = @transform_2, window_bounds = array<i64: 3, 64>}, {pipeline_mode = #tpu.pipeline_mode<synchronous>, transform_indices = @transform_3, window_bounds = array<i64: 1, 64>}, {pipeline_mode = #tpu.pipeline_mode<synchronous>, transform_indices = @transform_4, window_bounds = array<i64: 64, 128>}, {pipeline_mode = #tpu.pipeline_mode<synchronous>, transform_indices = @transform_5, window_bounds = array<i64: 1, 128>}, {pipeline_mode = #tpu.pipeline_mode<synchronous>, transform_indices = @transform_6, window_bounds = array<i64: 128, 64>}, {pipeline_mode = #tpu.pipeline_mode<synchronous>, transform_indices = @transform_7, window_bounds = array<i64: 1, 64>}, {pipeline_mode = #tpu.pipeline_mode<synchronous>, transform_indices = @transform_8, window_bounds = array<i64: 128, 64>}, {pipeline_mode = #tpu.pipeline_mode<synchronous>, transform_indices = @transform_9, window_bounds = array<i64: 1280, 64>}, {pipeline_mode = #tpu.pipeline_mode<synchronous>, transform_indices = @transform_10, window_bounds = array<i64: 1, 64>}, {pipeline_mode = #tpu.pipeline_mode<synchronous>, transform_indices = @transform_11, window_bounds = array<i64: 128, 128>}, {pipeline_mode = #tpu.pipeline_mode<synchronous>, transform_indices = @transform_12, window_bounds = array<i64: 1, 128>}, {transform_indices = @transform_13, window_bounds = array<i64: 16, 128>}]} {
    %c0 = arith.constant 0 : index
    %c0_0 = arith.constant 0 : index
    %0 = vector.load %arg1[%c0, %c0_0] : memref<16x3xf32, #tpu.memory_space<vmem>>, vector<16x3xf32>
    %c0_1 = arith.constant 0 : index
    %c0_2 = arith.constant 0 : index
    %1 = vector.load %arg3[%c0_1, %c0_2] : memref<3x64xf32, #tpu.memory_space<vmem>>, vector<3x64xf32>
    %c0_3 = arith.constant 0 : index
    %c0_4 = arith.constant 0 : index
    %2 = vector.load %arg4[%c0_3, %c0_4] : memref<1x64xf32, #tpu.memory_space<vmem>>, vector<1x64xf32>
    %c0_5 = arith.constant 0 : index
    %c0_6 = arith.constant 0 : index
    %3 = vector.load %arg5[%c0_5, %c0_6] : memref<64x128xf32, #tpu.memory_space<vmem>>, vector<64x128xf32>
    %c0_7 = arith.constant 0 : index
    %c0_8 = arith.constant 0 : index
    %4 = vector.load %arg6[%c0_7, %c0_8] : memref<1x128xf32, #tpu.memory_space<vmem>>, vector<1x128xf32>
    %c0_9 = arith.constant 0 : index
    %c0_10 = arith.constant 0 : index
    %5 = vector.load %arg7[%c0_9, %c0_10] : memref<128x64xf32, #tpu.memory_space<vmem>>, vector<128x64xf32>
    %c0_11 = arith.constant 0 : index
    %c0_12 = arith.constant 0 : index
    %6 = vector.load %arg8[%c0_11, %c0_12] : memref<1x64xf32, #tpu.memory_space<vmem>>, vector<1x64xf32>
    %7 = vector.extract_strided_slice %0 {offsets = [0, 0], sizes = [16, 1], strides = [1, 1]} : vector<16x3xf32> to vector<16x1xf32>
    %8 = vector.extract_strided_slice %1 {offsets = [0, 0], sizes = [1, 64], strides = [1, 1]} : vector<3x64xf32> to vector<1x64xf32>
    %9 = vector.broadcast %7 : vector<16x1xf32> to vector<16x64xf32>
    %10 = vector.broadcast %8 : vector<1x64xf32> to vector<16x64xf32>
    %11 = arith.mulf %9, %10 : vector<16x64xf32>
    %12 = vector.broadcast %2 : vector<1x64xf32> to vector<16x64xf32>
    %13 = arith.addf %12, %11 : vector<16x64xf32>
    %14 = vector.extract_strided_slice %0 {offsets = [0, 1], sizes = [16, 1], strides = [1, 1]} : vector<16x3xf32> to vector<16x1xf32>
    %15 = vector.extract_strided_slice %1 {offsets = [1, 0], sizes = [1, 64], strides = [1, 1]} : vector<3x64xf32> to vector<1x64xf32>
    %16 = vector.broadcast %14 : vector<16x1xf32> to vector<16x64xf32>
    %17 = vector.broadcast %15 : vector<1x64xf32> to vector<16x64xf32>
    %18 = arith.mulf %16, %17 : vector<16x64xf32>
    %19 = arith.addf %13, %18 : vector<16x64xf32>
    %20 = vector.extract_strided_slice %0 {offsets = [0, 2], sizes = [16, 1], strides = [1, 1]} : vector<16x3xf32> to vector<16x1xf32>
    %21 = vector.extract_strided_slice %1 {offsets = [2, 0], sizes = [1, 64], strides = [1, 1]} : vector<3x64xf32> to vector<1x64xf32>
    %22 = vector.broadcast %20 : vector<16x1xf32> to vector<16x64xf32>
    %23 = vector.broadcast %21 : vector<1x64xf32> to vector<16x64xf32>
    %24 = arith.mulf %22, %23 : vector<16x64xf32>
    %25 = arith.addf %19, %24 : vector<16x64xf32>
    %cst = arith.constant 0.000000e+00 : f32
    %26 = vector.broadcast %cst : f32 to vector<16x64xf32>
    %27 = arith.maximumf %25, %26 : vector<16x64xf32>
    %cst_13 = arith.constant dense<0.000000e+00> : vector<16x128xf32>
    %28 = tpu.matmul %27, %3, %cst_13 {dimension_numbers = #tpu.dot_dimension_numbers<[1], [0], [0], [1], [0, 0, 1, 1], [], []>} : vector<16x64xf32>, vector<64x128xf32>, vector<16x128xf32> -> vector<16x128xf32>
    %29 = vector.broadcast %4 : vector<1x128xf32> to vector<16x128xf32>
    %30 = arith.addf %28, %29 : vector<16x128xf32>
    %cst_14 = arith.constant dense<0.000000e+00> : vector<16x64xf32>
    %31 = tpu.matmul %30, %5, %cst_14 {dimension_numbers = #tpu.dot_dimension_numbers<[1], [0], [0], [1], [0, 0, 1, 1], [], []>} : vector<16x128xf32>, vector<128x64xf32>, vector<16x64xf32> -> vector<16x64xf32>
    %32 = vector.broadcast %6 : vector<1x64xf32> to vector<16x64xf32>
    %33 = arith.addf %31, %32 : vector<16x64xf32>
    %cst_15 = arith.constant 0.000000e+00 : f32
    %34 = vector.broadcast %cst_15 : f32 to vector<16x64xf32>
    %35 = arith.maximumf %33, %34 : vector<16x64xf32>
    %36 = arith.truncf %30 : vector<16x128xf32> to vector<16x128xbf16>
    %c0_16 = arith.constant 0 : index
    %c0_17 = arith.constant 0 : index
    %37 = vector.load %arg9[%c0_16, %c0_17] : memref<128x64xbf16, #tpu.memory_space<vmem>>, vector<128x64xbf16>
    %cst_18 = arith.constant dense<0.000000e+00> : vector<16x64xf32>
    %38 = tpu.matmul %36, %37, %cst_18 {dimension_numbers = #tpu.dot_dimension_numbers<[1], [0], [0], [1], [0, 0, 1, 1], [], []>} : vector<16x128xbf16>, vector<128x64xbf16>, vector<16x64xf32> -> vector<16x64xf32>
    %c0_19 = arith.constant 0 : index
    %c0_20 = arith.constant 0 : index
    %39 = vector.load %arg2[%c0_19, %c0_20] : memref<16x1280xbf16, #tpu.memory_space<vmem>>, vector<16x1280xbf16>
    %c0_21 = arith.constant 0 : index
    %c0_22 = arith.constant 0 : index
    %40 = vector.load %arg10[%c0_21, %c0_22] : memref<1280x64xbf16, #tpu.memory_space<vmem>>, vector<1280x64xbf16>
    %cst_23 = arith.constant dense<0.000000e+00> : vector<16x64xf32>
    %41 = tpu.matmul %39, %40, %cst_23 {dimension_numbers = #tpu.dot_dimension_numbers<[1], [0], [0], [1], [0, 0, 1, 1], [], []>} : vector<16x1280xbf16>, vector<1280x64xbf16>, vector<16x64xf32> -> vector<16x64xf32>
    %42 = arith.addf %38, %41 : vector<16x64xf32>
    %c0_24 = arith.constant 0 : index
    %c0_25 = arith.constant 0 : index
    %43 = vector.load %arg11[%c0_24, %c0_25] : memref<1x64xf32, #tpu.memory_space<vmem>>, vector<1x64xf32>
    %44 = vector.broadcast %43 : vector<1x64xf32> to vector<16x64xf32>
    %45 = arith.addf %42, %44 : vector<16x64xf32>
    %cst_26 = arith.constant 0.000000e+00 : f32
    %46 = vector.broadcast %cst_26 : f32 to vector<16x64xf32>
    %47 = arith.maximumf %45, %46 : vector<16x64xf32>
    %48 = tpu.concatenate %47, %35 in 1 : vector<16x64xf32>, vector<16x64xf32> -> vector<16x128xf32>
    %c0_27 = arith.constant 0 : index
    %c0_28 = arith.constant 0 : index
    %49 = vector.load %arg12[%c0_27, %c0_28] : memref<128x128xf32, #tpu.memory_space<vmem>>, vector<128x128xf32>
    %cst_29 = arith.constant dense<0.000000e+00> : vector<16x128xf32>
    %50 = tpu.matmul %48, %49, %cst_29 {dimension_numbers = #tpu.dot_dimension_numbers<[1], [0], [0], [1], [0, 0, 1, 1], [], []>} : vector<16x128xf32>, vector<128x128xf32>, vector<16x128xf32> -> vector<16x128xf32>
    %c0_30 = arith.constant 0 : index
    %c0_31 = arith.constant 0 : index
    %51 = vector.load %arg13[%c0_30, %c0_31] : memref<1x128xf32, #tpu.memory_space<vmem>>, vector<1x128xf32>
    %52 = vector.broadcast %51 : vector<1x128xf32> to vector<16x128xf32>
    %53 = arith.addf %50, %52 : vector<16x128xf32>
    %c0_32 = arith.constant 0 : index
    %c0_33 = arith.constant 0 : index
    %54 = vector.load %arg14[%c0_32, %c0_33] : memref<16x128xf32, #tpu.memory_space<vmem>>, vector<16x128xf32>
    tpu.vector_store %arg14[%c0_32, %c0_33], %53 {strides = array<i32>} : memref<16x128xf32, #tpu.memory_space<vmem>>, vector<16x128xf32>,
    return
  }
  func.func @transform_0(%arg0: i32) -> (i32, i32) {
    %c0_i32 = arith.constant 0 : i32
    %c0_i32_0 = arith.constant 0 : i32
    return %arg0, %c0_i32 : i32, i32
  }
  func.func @transform_1(%arg0: i32) -> (i32, i32) {
    %c0_i32 = arith.constant 0 : i32
    %c0_i32_0 = arith.constant 0 : i32
    return %arg0, %c0_i32 : i32, i32
  }
  func.func @transform_2(%arg0: i32) -> (i32, i32) {
    %c0_i32 = arith.constant 0 : i32
    %c0_i32_0 = arith.constant 0 : i32
    %c0_i32_1 = arith.constant 0 : i32
    return %c0_i32, %c0_i32_0 : i32, i32
  }
  func.func @transform_3(%arg0: i32) -> (i32, i32) {
    %c0_i32 = arith.constant 0 : i32
    %c0_i32_0 = arith.constant 0 : i32
    %c0_i32_1 = arith.constant 0 : i32
    return %c0_i32, %c0_i32_0 : i32, i32
  }
  func.func @transform_4(%arg0: i32) -> (i32, i32) {
    %c0_i32 = arith.constant 0 : i32
    %c0_i32_0 = arith.constant 0 : i32
    %c0_i32_1 = arith.constant 0 : i32
    return %c0_i32, %c0_i32_0 : i32, i32
  }
  func.func @transform_5(%arg0: i32) -> (i32, i32) {
    %c0_i32 = arith.constant 0 : i32
    %c0_i32_0 = arith.constant 0 : i32
    %c0_i32_1 = arith.constant 0 : i32
    return %c0_i32, %c0_i32_0 : i32, i32
  }
  func.func @transform_6(%arg0: i32) -> (i32, i32) {
    %c0_i32 = arith.constant 0 : i32
    %c0_i32_0 = arith.constant 0 : i32
    %c0_i32_1 = arith.constant 0 : i32
    return %c0_i32, %c0_i32_0 : i32, i32
  }
  func.func @transform_7(%arg0: i32) -> (i32, i32) {
    %c0_i32 = arith.constant 0 : i32
    %c0_i32_0 = arith.constant 0 : i32
    %c0_i32_1 = arith.constant 0 : i32
    return %c0_i32, %c0_i32_0 : i32, i32
  }
  func.func @transform_8(%arg0: i32) -> (i32, i32) {
    %c0_i32 = arith.constant 0 : i32
    %c0_i32_0 = arith.constant 0 : i32
    %c0_i32_1 = arith.constant 0 : i32
    return %c0_i32, %c0_i32_0 : i32, i32
  }
  func.func @transform_9(%arg0: i32) -> (i32, i32) {
    %c0_i32 = arith.constant 0 : i32
    %c0_i32_0 = arith.constant 0 : i32
    %c0_i32_1 = arith.constant 0 : i32
    return %c0_i32, %c0_i32_0 : i32, i32
  }
  func.func @transform_10(%arg0: i32) -> (i32, i32) {
    %c0_i32 = arith.constant 0 : i32
    %c0_i32_0 = arith.constant 0 : i32
    %c0_i32_1 = arith.constant 0 : i32
    return %c0_i32, %c0_i32_0 : i32, i32
  }
  func.func @transform_11(%arg0: i32) -> (i32, i32) {
    %c0_i32 = arith.constant 0 : i32
    %c0_i32_0 = arith.constant 0 : i32
    %c0_i32_1 = arith.constant 0 : i32
    return %c0_i32, %c0_i32_0 : i32, i32
  }
  func.func @transform_12(%arg0: i32) -> (i32, i32) {
    %c0_i32 = arith.constant 0 : i32
    %c0_i32_0 = arith.constant 0 : i32
    %c0_i32_1 = arith.constant 0 : i32
    return %c0_i32, %c0_i32_0 : i32, i32
  }
  func.func @transform_13(%arg0: i32) -> (i32, i32) {
    %c0_i32 = arith.constant 0 : i32
    %c0_i32_0 = arith.constant 0 : i32
    return %arg0, %c0_i32 : i32, i32
  }
}

</mosaic_0001>

<llo_original>
// kernel: tpu_custom_call.1
$region0: #{tpu_custom_call.1}
  #allocation0 [shape = 'u32[]', space=smem, size = 0x4, offset = 0x4, fixed_abs, tag = 'smem constant byte address 0x4 - core index']
  #allocation1 [shape = 'u32[72,128]{1,0:T(1,128)}', space=vmem, size = 0x9000, scoped, tag = 'internal scratch']
  %s0 = inlined_call_operand.vmem [shape: f32[16,3], index: 0, kind: input, shape index: {}]
  %s1 = inlined_call_operand.vmem [shape: bf16[16,1280], index: 1, kind: input, shape index: {}]
  %s2 = inlined_call_operand.vmem [shape: f32[3,64], index: 2, kind: input, shape index: {}]
  %s3 = inlined_call_operand.vmem [shape: f32[1,64], index: 3, kind: input, shape index: {}]
  %s4 = inlined_call_operand.vmem [shape: f32[64,128], index: 4, kind: input, shape index: {}]
  %s5 = inlined_call_operand.vmem [shape: f32[1,128], index: 5, kind: input, shape index: {}]
  %s6 = inlined_call_operand.vmem [shape: f32[128,64], index: 6, kind: input, shape index: {}]
  %s7 = inlined_call_operand.vmem [shape: f32[1,64], index: 7, kind: input, shape index: {}]
  %s8 = inlined_call_operand.vmem [shape: bf16[128,64], index: 8, kind: input, shape index: {}]
  %s9 = inlined_call_operand.vmem [shape: bf16[1280,64], index: 9, kind: input, shape index: {}]
  %s10 = inlined_call_operand.vmem [shape: f32[1,64], index: 10, kind: input, shape index: {}]
  %s11 = inlined_call_operand.vmem [shape: f32[128,128], index: 11, kind: input, shape index: {}]
  %s12 = inlined_call_operand.vmem [shape: f32[1,128], index: 12, kind: input, shape index: {}]
  %s13 = inlined_call_operand.hbm [shape: f32[16,128], index: 13, kind: output, shape index: {}]
  %s14 = sld [smem:[#allocation0]]
  $region62: #{tpu_custom_call.1} parent=0
    _
  %s16 = ssub.s32 1, %s14
  %s17 = scalar_select 0, %s16, %s14
  $region1: #{tpu_custom_call.1} parent=0
    #allocation2 [shape = 'u8[8192]{0}', space=vmem, size = 0x2000, scoped, tag = 'output window, operand 0, single buffered']
    #allocation3 [shape = 's32[1]{0}', space=sflag, size = 0x4, scoped, tag = 'scoped memory for tpu_custom_call.1']
    %18 = vsyncpa [#allocation3], 0
    // Predicated region
    $region2: #{tpu_custom_call.1} parent=1 // pred_check
      _
    $region3: #{tpu_custom_call.1} parent=1 // pred_check_branch
      %20 = sbr.rel (0) target = $region5
    $region4: #{tpu_custom_call.1} parent=1 // pred_region
      _
    $region5: #{tpu_custom_call.1} parent=1 // pred_fallthru
      _
    // Predicated region
    $region6: #{tpu_custom_call.1} parent=1 // pred_check
      _
    $region7: #{tpu_custom_call.1} parent=1 // pred_check_branch
      %22 = sbr.rel (0) target = $region9
    $region8: #{tpu_custom_call.1} parent=1 // pred_region
      _
    $region9: #{tpu_custom_call.1} parent=1 // pred_fallthru
      _
    // Predicated region
    $region10: #{tpu_custom_call.1} parent=1 // pred_check
      _
    $region11: #{tpu_custom_call.1} parent=1 // pred_check_branch
      %24 = sbr.rel (0) target = $region13
    $region12: #{tpu_custom_call.1} parent=1 // pred_region
      _
    $region13: #{tpu_custom_call.1} parent=1 // pred_fallthru
      _
    // Predicated region
    $region14: #{tpu_custom_call.1} parent=1 // pred_check
      _
    $region15: #{tpu_custom_call.1} parent=1 // pred_check_branch
      %26 = sbr.rel (0) target = $region17
    $region16: #{tpu_custom_call.1} parent=1 // pred_region
      _
    $region17: #{tpu_custom_call.1} parent=1 // pred_fallthru
      _
    // Predicated region
    $region18: #{tpu_custom_call.1} parent=1 // pred_check
      _
    $region19: #{tpu_custom_call.1} parent=1 // pred_check_branch
      %28 = sbr.rel (0) target = $region21
    $region20: #{tpu_custom_call.1} parent=1 // pred_region
      _
    $region21: #{tpu_custom_call.1} parent=1 // pred_fallthru
      _
    // Predicated region
    $region22: #{tpu_custom_call.1} parent=1 // pred_check
      _
    $region23: #{tpu_custom_call.1} parent=1 // pred_check_branch
      %30 = sbr.rel (0) target = $region25
    $region24: #{tpu_custom_call.1} parent=1 // pred_region
      _
    $region25: #{tpu_custom_call.1} parent=1 // pred_fallthru
      _
    // Predicated region
    $region26: #{tpu_custom_call.1} parent=1 // pred_check
      _
    $region27: #{tpu_custom_call.1} parent=1 // pred_check_branch
      %32 = sbr.rel (0) target = $region29
    $region28: #{tpu_custom_call.1} parent=1 // pred_region
      _
    $region29: #{tpu_custom_call.1} parent=1 // pred_fallthru
      _
    // Predicated region
    $region30: #{tpu_custom_call.1} parent=1 // pred_check
      _
    $region31: #{tpu_custom_call.1} parent=1 // pred_check_branch
      %34 = sbr.rel (0) target = $region33
    $region32: #{tpu_custom_call.1} parent=1 // pred_region
      _
    $region33: #{tpu_custom_call.1} parent=1 // pred_fallthru
      _
    // Predicated region
    $region34: #{tpu_custom_call.1} parent=1 // pred_check
      _
    $region35: #{tpu_custom_call.1} parent=1 // pred_check_branch
      %36 = sbr.rel (0) target = $region37
    $region36: #{tpu_custom_call.1} parent=1 // pred_region
      _
    $region37: #{tpu_custom_call.1} parent=1 // pred_fallthru
      _
    // Predicated region
    $region38: #{tpu_custom_call.1} parent=1 // pred_check
      _
    $region39: #{tpu_custom_call.1} parent=1 // pred_check_branch
      %38 = sbr.rel (0) target = $region41
    $region40: #{tpu_custom_call.1} parent=1 // pred_region
      _
    $region41: #{tpu_custom_call.1} parent=1 // pred_fallthru
      _
    // Predicated region
    $region42: #{tpu_custom_call.1} parent=1 // pred_check
      _
    $region43: #{tpu_custom_call.1} parent=1 // pred_check_branch
      %40 = sbr.rel (0) target = $region45
    $region44: #{tpu_custom_call.1} parent=1 // pred_region
      _
    $region45: #{tpu_custom_call.1} parent=1 // pred_fallthru
      _
    // Predicated region
    $region46: #{tpu_custom_call.1} parent=1 // pred_check
      _
    $region47: #{tpu_custom_call.1} parent=1 // pred_check_branch
      %42 = sbr.rel (0) target = $region49
    $region48: #{tpu_custom_call.1} parent=1 // pred_region
      _
    $region49: #{tpu_custom_call.1} parent=1 // pred_fallthru
      _
    // Predicated region
    $region50: #{tpu_custom_call.1} parent=1 // pred_check
      _
    $region51: #{tpu_custom_call.1} parent=1 // pred_check_branch
      %44 = sbr.rel (0) target = $region53
    $region52: #{tpu_custom_call.1} parent=1 // pred_region
      _
    $region53: #{tpu_custom_call.1} parent=1 // pred_fallthru
      _
    %v45 = vld [vmem:[%s0] sm:$0xff]
    %v46 = vld [vmem:[%s0 + $0x8] sm:$0xff]
    %v47 = vld [vmem:[%s2] sm:$0x7]
    %v48 = vld [vmem:[%s3] sm:$0x1]
    %v49 = vld [vmem:[%s4] sm:$0xff]
    %v50 = vld [vmem:[%s4 + $0x8] sm:$0xff]
    %v51 = vld [vmem:[%s4 + $0x10] sm:$0xff]
    %v52 = vld [vmem:[%s4 + $0x18] sm:$0xff]
    %v53 = vld [vmem:[%s4 + $0x20] sm:$0xff]
    %v54 = vld [vmem:[%s4 + $0x28] sm:$0xff]
    %v55 = vld [vmem:[%s4 + $0x30] sm:$0xff]
    %v56 = vld [vmem:[%s4 + $0x38] sm:$0xff]
    %v57 = vld [vmem:[%s5] sm:$0x1]
    %v58 = vld [vmem:[%s6] sm:$0xff]
    %v59 = vld [vmem:[%s6 + $0x8] sm:$0xff]
    %v60 = vld [vmem:[%s6 + $0x10] sm:$0xff]
    %v61 = vld [vmem:[%s6 + $0x18] sm:$0xff]
    %v62 = vld [vmem:[%s6 + $0x20] sm:$0xff]
    %v63 = vld [vmem:[%s6 + $0x28] sm:$0xff]
    %v64 = vld [vmem:[%s6 + $0x30] sm:$0xff]
    %v65 = vld [vmem:[%s6 + $0x38] sm:$0xff]
    %v66 = vld [vmem:[%s6 + $0x40] sm:$0xff]
    %v67 = vld [vmem:[%s6 + $0x48] sm:$0xff]
    %v68 = vld [vmem:[%s6 + $0x50] sm:$0xff]
    %v69 = vld [vmem:[%s6 + $0x58] sm:$0xff]
    %v70 = vld [vmem:[%s6 + $0x60] sm:$0xff]
    %v71 = vld [vmem:[%s6 + $0x68] sm:$0xff]
    %v72 = vld [vmem:[%s6 + $0x70] sm:$0xff]
    %v73 = vld [vmem:[%s6 + $0x78] sm:$0xff]
    %v74 = vld [vmem:[%s7] sm:$0x1]
    %76 = vset.pattern.permute.xlu0 0
    %77 = vperm.xlu0 %76, %v45
    %v78 = vpop.permute.xlu0 %77
    %81 = vset.pattern.permute.xlu0 0
    %82 = vperm.xlu0 %81, %v46
    %v83 = vpop.permute.xlu0 %82
    %v85 = vperm.slane %v47, 0
    %v86 = vmul.f32 %v78, %v85
    %v87 = vmul.f32 %v83, %v85
    %v89 = vperm.slane %v48, 0
    %v91 = vadd.f32 %v89, %v86
    %v92 = vadd.f32 %v89, %v87
    %93 = vset.pattern.permute.xlu0 1
    %94 = vperm.xlu0 %93, %v45
    %v95 = vpop.permute.xlu0 %94
    %97 = vset.pattern.permute.xlu0 1
    %98 = vperm.xlu0 %97, %v46
    %v99 = vpop.permute.xlu0 %98
    %v101 = vperm.slane %v47, 1
    %v102 = vmul.f32 %v95, %v101
    %v103 = vmul.f32 %v99, %v101
    %v104 = vadd.f32 %v91, %v102
    %v105 = vadd.f32 %v92, %v103
    %106 = vset.pattern.permute.xlu0 2
    %107 = vperm.xlu0 %106, %v45
    %v108 = vpop.permute.xlu0 %107
    %110 = vset.pattern.permute.xlu0 2
    %111 = vperm.xlu0 %110, %v46
    %v112 = vpop.permute.xlu0 %111
    %v114 = vperm.slane %v47, 2
    %v115 = vmul.f32 %v108, %v114
    %v116 = vmul.f32 %v112, %v114
    %v117 = vadd.f32 %v104, %v115
    %v118 = vadd.f32 %v105, %v116
    %v119 = vmax.f32 %v117, 0.0
    %v120 = vmax.f32 %v118, 0.0
    %v122 = vperm.slane %v57, 0
    %vm124 = vcmask 523264
    %v126 = vsel %vm124, %v119, 0
    %v129 = vsel %vm124, %v120, 0
    %131 = vmatpush.msra.mxu0 0.0
    %132 = vmatpush.msra.mxu0 0.0
    %133 = vmatpush.msra.mxu0 0.0
    %134 = vmatpush.msra.mxu0 0.0
    %135 = vmatpush.msra.mxu0 0.0
    %136 = vmatpush.msra.mxu0 0.0
    %137 = vmatpush.msra.mxu0 0.0
    %138 = vmatpush.msra.mxu0 0.0
    %139 = vmatpush.msra.mxu0 %v56
    %140 = vmatpush.msra.mxu0 %v55
    %141 = vmatpush.msra.mxu0 %v54
    %142 = vmatpush.msra.mxu0 %v53
    %143 = vmatpush.msra.mxu0 %v52
    %144 = vmatpush.msra.mxu0 %v51
    %145 = vmatpush.msra.mxu0 %v50
    %146 = vmatpush.msra.mxu0 %v49
    %147 = vmatmul.f32.gmra.mxu0 %v126
    %v148 = vpop.f32.mrf.mxu0
    %v149 = vadd.f32 %v122, %v148
    %150 = vmatmul.f32.gmra.mxu0 %v129
    %v151 = vpop.f32.mrf.mxu0
    %v152 = vadd.f32 %v122, %v151
    %153 = vdwg.mxu0
    %v155 = vperm.slane %v74, 0
    %157 = vmatpush.msra.mxu0 %v73
    %158 = vmatpush.msra.mxu0 %v72
    %159 = vmatpush.msra.mxu0 %v71
    %160 = vmatpush.msra.mxu0 %v70
    %161 = vmatpush.msra.mxu0 %v69
    %162 = vmatpush.msra.mxu0 %v68
    %163 = vmatpush.msra.mxu0 %v67
    %164 = vmatpush.msra.mxu0 %v66
    %165 = vmatpush.msra.mxu0 %v65
    %166 = vmatpush.msra.mxu0 %v64
    %167 = vmatpush.msra.mxu0 %v63
    %168 = vmatpush.msra.mxu0 %v62
    %169 = vmatpush.msra.mxu0 %v61
    %170 = vmatpush.msra.mxu0 %v60
    %171 = vmatpush.msra.mxu0 %v59
    %172 = vmatpush.msra.mxu0 %v58
    %173 = vmatmul.f32.gmra.mxu0 %v149
    %v174 = vpop.f32.mrf.mxu0
    %v175 = vadd.f32 %v155, %v174
    %176 = vmatmul.f32.gmra.mxu0 %v152
    %v177 = vpop.f32.mrf.mxu0
    %v178 = vadd.f32 %v155, %v177
    %179 = vdwg.mxu0
    %v180 = vmax.f32 %v175, 0.0
    %v181 = vmax.f32 %v178, 0.0
    %v182 = vpack.c.bf16 %v152, %v149
    %v183 = vld [vmem:[%s8] sm:$0xf]
    %v184 = vld [vmem:[%s8 + $0x4] sm:$0xf]
    %v185 = vld [vmem:[%s8 + $0x8] sm:$0xf]
    %v186 = vld [vmem:[%s8 + $0xc] sm:$0xf]
    %v187 = vld [vmem:[%s8 + $0x10] sm:$0xf]
    %v188 = vld [vmem:[%s8 + $0x14] sm:$0xf]
    %v189 = vld [vmem:[%s8 + $0x18] sm:$0xf]
    %v190 = vld [vmem:[%s8 + $0x1c] sm:$0xf]
    %v191 = vld [vmem:[%s8 + $0x20] sm:$0xf]
    %v192 = vld [vmem:[%s8 + $0x24] sm:$0xf]
    %v193 = vld [vmem:[%s8 + $0x28] sm:$0xf]
    %v194 = vld [vmem:[%s8 + $0x2c] sm:$0xf]
    %v195 = vld [vmem:[%s8 + $0x30] sm:$0xf]
    %v196 = vld [vmem:[%s8 + $0x34] sm:$0xf]
    %v197 = vld [vmem:[%s8 + $0x38] sm:$0xf]
    %v198 = vld [vmem:[%s8 + $0x3c] sm:$0xf]
    %v199 = vld [vmem:[%s1] sm:$0xff]
    %v200 = vld [vmem:[%s1 + $0x8] sm:$0xff]
    %v201 = vld [vmem:[%s1 + $0x10] sm:$0xff]
    %v202 = vld [vmem:[%s1 + $0x18] sm:$0xff]
    %v203 = vld [vmem:[%s1 + $0x20] sm:$0xff]
    %v204 = vld [vmem:[%s1 + $0x28] sm:$0xff]
    %v205 = vld [vmem:[%s1 + $0x30] sm:$0xff]
    %v206 = vld [vmem:[%s1 + $0x38] sm:$0xff]
    %v207 = vld [vmem:[%s1 + $0x40] sm:$0xff]
    %v208 = vld [vmem:[%s1 + $0x48] sm:$0xff]
    %v209 = vld [vmem:[%s9] sm:$0xf]
    %v210 = vld [vmem:[%s9 + $0x4] sm:$0xf]
    %v211 = vld [vmem:[%s9 + $0x8] sm:$0xf]
    %v212 = vld [vmem:[%s9 + $0xc] sm:$0xf]
    %v213 = vld [vmem:[%s9 + $0x10] sm:$0xf]
    %v214 = vld [vmem:[%s9 + $0x14] sm:$0xf]
    %v215 = vld [vmem:[%s9 + $0x18] sm:$0xf]
    %v216 = vld [vmem:[%s9 + $0x1c] sm:$0xf]
    %v217 = vld [vmem:[%s9 + $0x20] sm:$0xf]
    %v218 = vld [vmem:[%s9 + $0x24] sm:$0xf]
    %v219 = vld [vmem:[%s9 + $0x28] sm:$0xf]
    %v220 = vld [vmem:[%s9 + $0x2c] sm:$0xf]
    %v221 = vld [vmem:[%s9 + $0x30] sm:$0xf]
    %v222 = vld [vmem:[%s9 + $0x34] sm:$0xf]
    %v223 = vld [vmem:[%s9 + $0x38] sm:$0xf]
    %v224 = vld [vmem:[%s9 + $0x3c] sm:$0xf]
    %v225 = vld [vmem:[%s9 + $0x40] sm:$0xf]
    %v226 = vld [vmem:[%s9 + $0x44] sm:$0xf]
    %v227 = vld [vmem:[%s9 + $0x48] sm:$0xf]
    %v228 = vld [vmem:[%s9 + $0x4c] sm:$0xf]
    %v229 = vld [vmem:[%s9 + $0x50] sm:$0xf]
    %v230 = vld [vmem:[%s9 + $0x54] sm:$0xf]
    %v231 = vld [vmem:[%s9 + $0x58] sm:$0xf]
    %v232 = vld [vmem:[%s9 + $0x5c] sm:$0xf]
    %v233 = vld [vmem:[%s9 + $0x60] sm:$0xf]
    %v234 = vld [vmem:[%s9 + $0x64] sm:$0xf]
    %v235 = vld [vmem:[%s9 + $0x68] sm:$0xf]
    %v236 = vld [vmem:[%s9 + $0x6c] sm:$0xf]
    %v237 = vld [vmem:[%s9 + $0x70] sm:$0xf]
    %v238 = vld [vmem:[%s9 + $0x74] sm:$0xf]
    %v239 = vld [vmem:[%s9 + $0x78] sm:$0xf]
    %v240 = vld [vmem:[%s9 + $0x7c] sm:$0xf]
    %v241 = vld [vmem:[%s9 + $0x80] sm:$0xf]
    %v242 = vld [vmem:[%s9 + $0x84] sm:$0xf]
    %v243 = vld [vmem:[%s9 + $0x88] sm:$0xf]
    %v244 = vld [vmem:[%s9 + $0x8c] sm:$0xf]
    %v245 = vld [vmem:[%s9 + $0x90] sm:$0xf]
    %v246 = vld [vmem:[%s9 + $0x94] sm:$0xf]
    %v247 = vld [vmem:[%s9 + $0x98] sm:$0xf]
    %v248 = vld [vmem:[%s9 + $0x9c] sm:$0xf]
    %v249 = vld [vmem:[%s9 + $0xa0] sm:$0xf]
    %v250 = vld [vmem:[%s9 + $0xa4] sm:$0xf]
    %v251 = vld [vmem:[%s9 + $0xa8] sm:$0xf]
    %v252 = vld [vmem:[%s9 + $0xac] sm:$0xf]
    %v253 = vld [vmem:[%s9 + $0xb0] sm:$0xf]
    %v254 = vld [vmem:[%s9 + $0xb4] sm:$0xf]
    %v255 = vld [vmem:[%s9 + $0xb8] sm:$0xf]
    %v256 = vld [vmem:[%s9 + $0xbc] sm:$0xf]
    %v257 = vld [vmem:[%s9 + $0xc0] sm:$0xf]
    %v258 = vld [vmem:[%s9 + $0xc4] sm:$0xf]
    %v259 = vld [vmem:[%s9 + $0xc8] sm:$0xf]
    %v260 = vld [vmem:[%s9 + $0xcc] sm:$0xf]
    %v261 = vld [vmem:[%s9 + $0xd0] sm:$0xf]
    %v262 = vld [vmem:[%s9 + $0xd4] sm:$0xf]
    %v263 = vld [vmem:[%s9 + $0xd8] sm:$0xf]
    %v264 = vld [vmem:[%s9 + $0xdc] sm:$0xf]
    %v265 = vld [vmem:[%s9 + $0xe0] sm:$0xf]
    %v266 = vld [vmem:[%s9 + $0xe4] sm:$0xf]
    %v267 = vld [vmem:[%s9 + $0xe8] sm:$0xf]
    %v268 = vld [vmem:[%s9 + $0xec] sm:$0xf]
    %v269 = vld [vmem:[%s9 + $0xf0] sm:$0xf]
    %v270 = vld [vmem:[%s9 + $0xf4] sm:$0xf]
    %v271 = vld [vmem:[%s9 + $0xf8] sm:$0xf]
    %v272 = vld [vmem:[%s9 + $0xfc] sm:$0xf]
    %v273 = vld [vmem:[%s9 + $0x100] sm:$0xf]
    %v274 = vld [vmem:[%s9 + $0x104] sm:$0xf]
    %v275 = vld [vmem:[%s9 + $0x108] sm:$0xf]
    %v276 = vld [vmem:[%s9 + $0x10c] sm:$0xf]
    %v277 = vld [vmem:[%s9 + $0x110] sm:$0xf]
    %v278 = vld [vmem:[%s9 + $0x114] sm:$0xf]
    %v279 = vld [vmem:[%s9 + $0x118] sm:$0xf]
    %v280 = vld [vmem:[%s9 + $0x11c] sm:$0xf]
    %v281 = vld [vmem:[%s9 + $0x120] sm:$0xf]
    %v282 = vld [vmem:[%s9 + $0x124] sm:$0xf]
    %v283 = vld [vmem:[%s9 + $0x128] sm:$0xf]
    %v284 = vld [vmem:[%s9 + $0x12c] sm:$0xf]
    %v285 = vld [vmem:[%s9 + $0x130] sm:$0xf]
    %v286 = vld [vmem:[%s9 + $0x134] sm:$0xf]
    %v287 = vld [vmem:[%s9 + $0x138] sm:$0xf]
    %v288 = vld [vmem:[%s9 + $0x13c] sm:$0xf]
    %v289 = vld [vmem:[%s9 + $0x140] sm:$0xf]
    %v290 = vld [vmem:[%s9 + $0x144] sm:$0xf]
    %v291 = vld [vmem:[%s9 + $0x148] sm:$0xf]
    %v292 = vld [vmem:[%s9 + $0x14c] sm:$0xf]
    %v293 = vld [vmem:[%s9 + $0x150] sm:$0xf]
    %v294 = vld [vmem:[%s9 + $0x154] sm:$0xf]
    %v295 = vld [vmem:[%s9 + $0x158] sm:$0xf]
    %v296 = vld [vmem:[%s9 + $0x15c] sm:$0xf]
    %v297 = vld [vmem:[%s9 + $0x160] sm:$0xf]
    %v298 = vld [vmem:[%s9 + $0x164] sm:$0xf]
    %v299 = vld [vmem:[%s9 + $0x168] sm:$0xf]
    %v300 = vld [vmem:[%s9 + $0x16c] sm:$0xf]
    %v301 = vld [vmem:[%s9 + $0x170] sm:$0xf]
    %v302 = vld [vmem:[%s9 + $0x174] sm:$0xf]
    %v303 = vld [vmem:[%s9 + $0x178] sm:$0xf]
    %v304 = vld [vmem:[%s9 + $0x17c] sm:$0xf]
    %v305 = vld [vmem:[%s9 + $0x180] sm:$0xf]
    %v306 = vld [vmem:[%s9 + $0x184] sm:$0xf]
    %v307 = vld [vmem:[%s9 + $0x188] sm:$0xf]
    %v308 = vld [vmem:[%s9 + $0x18c] sm:$0xf]
    %v309 = vld [vmem:[%s9 + $0x190] sm:$0xf]
    %v310 = vld [vmem:[%s9 + $0x194] sm:$0xf]
    %v311 = vld [vmem:[%s9 + $0x198] sm:$0xf]
    %v312 = vld [vmem:[%s9 + $0x19c] sm:$0xf]
    %v313 = vld [vmem:[%s9 + $0x1a0] sm:$0xf]
    %v314 = vld [vmem:[%s9 + $0x1a4] sm:$0xf]
    %v315 = vld [vmem:[%s9 + $0x1a8] sm:$0xf]
    %v316 = vld [vmem:[%s9 + $0x1ac] sm:$0xf]
    %v317 = vld [vmem:[%s9 + $0x1b0] sm:$0xf]
    %v318 = vld [vmem:[%s9 + $0x1b4] sm:$0xf]
    %v319 = vld [vmem:[%s9 + $0x1b8] sm:$0xf]
    %v320 = vld [vmem:[%s9 + $0x1bc] sm:$0xf]
    %v321 = vld [vmem:[%s9 + $0x1c0] sm:$0xf]
    %v322 = vld [vmem:[%s9 + $0x1c4] sm:$0xf]
    %v323 = vld [vmem:[%s9 + $0x1c8] sm:$0xf]
    %v324 = vld [vmem:[%s9 + $0x1cc] sm:$0xf]
    %v325 = vld [vmem:[%s9 + $0x1d0] sm:$0xf]
    %v326 = vld [vmem:[%s9 + $0x1d4] sm:$0xf]
    %v327 = vld [vmem:[%s9 + $0x1d8] sm:$0xf]
    %v328 = vld [vmem:[%s9 + $0x1dc] sm:$0xf]
    %v329 = vld [vmem:[%s9 + $0x1e0] sm:$0xf]
    %v330 = vld [vmem:[%s9 + $0x1e4] sm:$0xf]
    %v331 = vld [vmem:[%s9 + $0x1e8] sm:$0xf]
    %v332 = vld [vmem:[%s9 + $0x1ec] sm:$0xf]
    %v333 = vld [vmem:[%s9 + $0x1f0] sm:$0xf]
    %v334 = vld [vmem:[%s9 + $0x1f4] sm:$0xf]
    %v335 = vld [vmem:[%s9 + $0x1f8] sm:$0xf]
    %v336 = vld [vmem:[%s9 + $0x1fc] sm:$0xf]
    %v337 = vld [vmem:[%s9 + $0x200] sm:$0xf]
    %v338 = vld [vmem:[%s9 + $0x204] sm:$0xf]
    %v339 = vld [vmem:[%s9 + $0x208] sm:$0xf]
    %v340 = vld [vmem:[%s9 + $0x20c] sm:$0xf]
    %v341 = vld [vmem:[%s9 + $0x210] sm:$0xf]
    %v342 = vld [vmem:[%s9 + $0x214] sm:$0xf]
    %v343 = vld [vmem:[%s9 + $0x218] sm:$0xf]
    %v344 = vld [vmem:[%s9 + $0x21c] sm:$0xf]
    %v345 = vld [vmem:[%s9 + $0x220] sm:$0xf]
    %v346 = vld [vmem:[%s9 + $0x224] sm:$0xf]
    %v347 = vld [vmem:[%s9 + $0x228] sm:$0xf]
    %v348 = vld [vmem:[%s9 + $0x22c] sm:$0xf]
    %v349 = vld [vmem:[%s9 + $0x230] sm:$0xf]
    %v350 = vld [vmem:[%s9 + $0x234] sm:$0xf]
    %v351 = vld [vmem:[%s9 + $0x238] sm:$0xf]
    %v352 = vld [vmem:[%s9 + $0x23c] sm:$0xf]
    %v353 = vld [vmem:[%s9 + $0x240] sm:$0xf]
    %v354 = vld [vmem:[%s9 + $0x244] sm:$0xf]
    %v355 = vld [vmem:[%s9 + $0x248] sm:$0xf]
    %v356 = vld [vmem:[%s9 + $0x24c] sm:$0xf]
    %v357 = vld [vmem:[%s9 + $0x250] sm:$0xf]
    %v358 = vld [vmem:[%s9 + $0x254] sm:$0xf]
    %v359 = vld [vmem:[%s9 + $0x258] sm:$0xf]
    %v360 = vld [vmem:[%s9 + $0x25c] sm:$0xf]
    %v361 = vld [vmem:[%s9 + $0x260] sm:$0xf]
    %v362 = vld [vmem:[%s9 + $0x264] sm:$0xf]
    %v363 = vld [vmem:[%s9 + $0x268] sm:$0xf]
    %v364 = vld [vmem:[%s9 + $0x26c] sm:$0xf]
    %v365 = vld [vmem:[%s9 + $0x270] sm:$0xf]
    %v366 = vld [vmem:[%s9 + $0x274] sm:$0xf]
    %v367 = vld [vmem:[%s9 + $0x278] sm:$0xf]
    %v368 = vld [vmem:[%s9 + $0x27c] sm:$0xf]
    %v379 = vunpack.c.l.b16 %v199
    %v380 = vunpack.c.h.b16 %v199
    %v381 = vunpack.c.l.b16 %v200
    %v382 = vunpack.c.h.b16 %v200
    %v383 = vunpack.c.l.b16 %v201
    %v384 = vunpack.c.h.b16 %v201
    %v385 = vunpack.c.l.b16 %v202
    %v386 = vunpack.c.h.b16 %v202
    %v387 = vunpack.c.l.b16 %v203
    %v388 = vunpack.c.h.b16 %v203
    %v389 = vunpack.c.l.b16 %v204
    %v390 = vunpack.c.h.b16 %v204
    %v391 = vunpack.c.l.b16 %v205
    %v392 = vunpack.c.h.b16 %v205
    %v393 = vunpack.c.l.b16 %v206
    %v394 = vunpack.c.h.b16 %v206
    %v395 = vunpack.c.l.b16 %v207
    %v396 = vunpack.c.h.b16 %v207
    %v397 = vunpack.c.l.b16 %v208
    %v398 = vunpack.c.h.b16 %v208
    %v399 = vpack.c.b16 %v389, %v379
    %v400 = vpack.c.b16 %v390, %v380
    %v401 = vpack.c.b16 %v391, %v381
    %v402 = vpack.c.b16 %v392, %v382
    %v403 = vpack.c.b16 %v393, %v383
    %v404 = vpack.c.b16 %v394, %v384
    %v405 = vpack.c.b16 %v395, %v385
    %v406 = vpack.c.b16 %v396, %v386
    %v407 = vpack.c.b16 %v397, %v387
    %v408 = vpack.c.b16 %v398, %v388
    %v579 = vunpack.c.l.b16 %v209
    %v580 = vunpack.c.l.b16 %v210
    %v581 = vunpack.c.l.b16 %v211
    %v582 = vunpack.c.l.b16 %v212
    %v583 = vunpack.c.l.b16 %v213
    %v584 = vunpack.c.l.b16 %v214
    %v585 = vunpack.c.l.b16 %v215
    %v586 = vunpack.c.l.b16 %v216
    %v587 = vunpack.c.l.b16 %v217
    %v588 = vunpack.c.l.b16 %v218
    %v589 = vunpack.c.l.b16 %v219
    %v590 = vunpack.c.l.b16 %v220
    %v591 = vunpack.c.l.b16 %v221
    %v592 = vunpack.c.l.b16 %v222
    %v593 = vunpack.c.l.b16 %v223
    %v594 = vunpack.c.l.b16 %v224
    %v595 = vunpack.c.l.b16 %v225
    %v596 = vunpack.c.l.b16 %v226
    %v597 = vunpack.c.l.b16 %v227
    %v598 = vunpack.c.l.b16 %v228
    %v599 = vunpack.c.l.b16 %v229
    %v600 = vunpack.c.l.b16 %v230
    %v601 = vunpack.c.l.b16 %v231
    %v602 = vunpack.c.l.b16 %v232
    %v603 = vunpack.c.l.b16 %v233
    %v604 = vunpack.c.l.b16 %v234
    %v605 = vunpack.c.l.b16 %v235
    %v606 = vunpack.c.l.b16 %v236
    %v607 = vunpack.c.l.b16 %v237
    %v608 = vunpack.c.l.b16 %v238
    %v609 = vunpack.c.l.b16 %v239
    %v610 = vunpack.c.l.b16 %v240
    %v611 = vunpack.c.l.b16 %v241
    %v612 = vunpack.c.l.b16 %v242
    %v613 = vunpack.c.l.b16 %v243
    %v614 = vunpack.c.l.b16 %v244
    %v615 = vunpack.c.l.b16 %v245
    %v616 = vunpack.c.l.b16 %v246
    %v617 = vunpack.c.l.b16 %v247
    %v618 = vunpack.c.l.b16 %v248
    %v619 = vunpack.c.l.b16 %v249
    %v620 = vunpack.c.l.b16 %v250
    %v621 = vunpack.c.l.b16 %v251
    %v622 = vunpack.c.l.b16 %v252
    %v623 = vunpack.c.l.b16 %v253
    %v624 = vunpack.c.l.b16 %v254
    %v625 = vunpack.c.l.b16 %v255
    %v626 = vunpack.c.l.b16 %v256
    %v627 = vunpack.c.l.b16 %v257
    %v628 = vunpack.c.l.b16 %v258
    %v629 = vunpack.c.l.b16 %v259
    %v630 = vunpack.c.l.b16 %v260
    %v631 = vunpack.c.l.b16 %v261
    %v632 = vunpack.c.l.b16 %v262
    %v633 = vunpack.c.l.b16 %v263
    %v634 = vunpack.c.l.b16 %v264
    %v635 = vunpack.c.l.b16 %v265
    %v636 = vunpack.c.l.b16 %v266
    %v637 = vunpack.c.l.b16 %v267
    %v638 = vunpack.c.l.b16 %v268
    %v639 = vunpack.c.l.b16 %v269
    %v640 = vunpack.c.l.b16 %v270
    %v641 = vunpack.c.l.b16 %v271
    %v642 = vunpack.c.l.b16 %v272
    %v643 = vunpack.c.l.b16 %v273
    %v644 = vunpack.c.l.b16 %v274
    %v645 = vunpack.c.l.b16 %v275
    %v646 = vunpack.c.l.b16 %v276
    %v647 = vunpack.c.l.b16 %v277
    %v648 = vunpack.c.l.b16 %v278
    %v649 = vunpack.c.l.b16 %v279
    %v650 = vunpack.c.l.b16 %v280
    %v651 = vunpack.c.l.b16 %v281
    %v652 = vunpack.c.l.b16 %v282
    %v653 = vunpack.c.l.b16 %v283
    %v654 = vunpack.c.l.b16 %v284
    %v655 = vunpack.c.l.b16 %v285
    %v656 = vunpack.c.l.b16 %v286
    %v657 = vunpack.c.l.b16 %v287
    %v658 = vunpack.c.l.b16 %v288
    %v659 = vunpack.c.l.b16 %v289
    %v660 = vunpack.c.l.b16 %v290
    %v661 = vunpack.c.l.b16 %v291
    %v662 = vunpack.c.l.b16 %v292
    %v663 = vunpack.c.l.b16 %v293
    %v664 = vunpack.c.l.b16 %v294
    %v665 = vunpack.c.l.b16 %v295
    %v666 = vunpack.c.l.b16 %v296
    %v667 = vunpack.c.l.b16 %v297
    %v668 = vunpack.c.l.b16 %v298
    %v669 = vunpack.c.l.b16 %v299
    %v670 = vunpack.c.l.b16 %v300
    %v671 = vunpack.c.l.b16 %v301
    %v672 = vunpack.c.l.b16 %v302
    %v673 = vunpack.c.l.b16 %v303
    %v674 = vunpack.c.l.b16 %v304
    %v675 = vunpack.c.l.b16 %v305
    %v676 = vunpack.c.l.b16 %v306
    %v677 = vunpack.c.l.b16 %v307
    %v678 = vunpack.c.l.b16 %v308
    %v679 = vunpack.c.l.b16 %v309
    %v680 = vunpack.c.l.b16 %v310
    %v681 = vunpack.c.l.b16 %v311
    %v682 = vunpack.c.l.b16 %v312
    %v683 = vunpack.c.l.b16 %v313
    %v684 = vunpack.c.l.b16 %v314
    %v685 = vunpack.c.l.b16 %v315
    %v686 = vunpack.c.l.b16 %v316
    %v687 = vunpack.c.l.b16 %v317
    %v688 = vunpack.c.l.b16 %v318
    %v689 = vunpack.c.l.b16 %v319
    %v690 = vunpack.c.l.b16 %v320
    %v691 = vunpack.c.l.b16 %v321
    %v692 = vunpack.c.l.b16 %v322
    %v693 = vunpack.c.l.b16 %v323
    %v694 = vunpack.c.l.b16 %v324
    %v695 = vunpack.c.l.b16 %v325
    %v696 = vunpack.c.l.b16 %v326
    %v697 = vunpack.c.l.b16 %v327
    %v698 = vunpack.c.l.b16 %v328
    %v699 = vunpack.c.l.b16 %v329
    %v700 = vunpack.c.l.b16 %v330
    %v701 = vunpack.c.l.b16 %v331
    %v702 = vunpack.c.l.b16 %v332
    %v703 = vunpack.c.l.b16 %v333
    %v704 = vunpack.c.l.b16 %v334
    %v705 = vunpack.c.l.b16 %v335
    %v706 = vunpack.c.l.b16 %v336
    %v707 = vunpack.c.l.b16 %v337
    %v708 = vunpack.c.l.b16 %v338
    %v709 = vunpack.c.l.b16 %v339
    %v710 = vunpack.c.l.b16 %v340
    %v711 = vunpack.c.l.b16 %v341
    %v712 = vunpack.c.l.b16 %v342
    %v713 = vunpack.c.l.b16 %v343
    %v714 = vunpack.c.l.b16 %v344
    %v715 = vunpack.c.l.b16 %v345
    %v716 = vunpack.c.l.b16 %v346
    %v717 = vunpack.c.l.b16 %v347
    %v718 = vunpack.c.l.b16 %v348
    %v719 = vunpack.c.l.b16 %v349
    %v720 = vunpack.c.l.b16 %v350
    %v721 = vunpack.c.l.b16 %v351
    %v722 = vunpack.c.l.b16 %v352
    %v723 = vunpack.c.l.b16 %v353
    %v724 = vunpack.c.l.b16 %v354
    %v725 = vunpack.c.l.b16 %v355
    %v726 = vunpack.c.l.b16 %v356
    %v727 = vunpack.c.l.b16 %v357
    %v728 = vunpack.c.l.b16 %v358
    %v729 = vunpack.c.l.b16 %v359
    %v730 = vunpack.c.l.b16 %v360
    %v731 = vunpack.c.l.b16 %v361
    %v732 = vunpack.c.l.b16 %v362
    %v733 = vunpack.c.l.b16 %v363
    %v734 = vunpack.c.l.b16 %v364
    %v735 = vunpack.c.l.b16 %v365
    %v736 = vunpack.c.l.b16 %v366
    %v737 = vunpack.c.l.b16 %v367
    %v738 = vunpack.c.l.b16 %v368
    %v739 = vpack.c.b16 %v580, %v579
    %v740 = vpack.c.b16 %v582, %v581
    %v741 = vpack.c.b16 %v584, %v583
    %v742 = vpack.c.b16 %v586, %v585
    %v743 = vpack.c.b16 %v588, %v587
    %v744 = vpack.c.b16 %v590, %v589
    %v745 = vpack.c.b16 %v592, %v591
    %v746 = vpack.c.b16 %v594, %v593
    %v747 = vpack.c.b16 %v596, %v595
    %v748 = vpack.c.b16 %v598, %v597
    %v749 = vpack.c.b16 %v600, %v599
    %v750 = vpack.c.b16 %v602, %v601
    %v751 = vpack.c.b16 %v604, %v603
    %v752 = vpack.c.b16 %v606, %v605
    %v753 = vpack.c.b16 %v608, %v607
    %v754 = vpack.c.b16 %v610, %v609
    %v755 = vpack.c.b16 %v612, %v611
    %v756 = vpack.c.b16 %v614, %v613
    %v757 = vpack.c.b16 %v616, %v615
    %v758 = vpack.c.b16 %v618, %v617
    %v759 = vpack.c.b16 %v620, %v619
    %v760 = vpack.c.b16 %v622, %v621
    %v761 = vpack.c.b16 %v624, %v623
    %v762 = vpack.c.b16 %v626, %v625
    %v763 = vpack.c.b16 %v628, %v627
    %v764 = vpack.c.b16 %v630, %v629
    %v765 = vpack.c.b16 %v632, %v631
    %v766 = vpack.c.b16 %v634, %v633
    %v767 = vpack.c.b16 %v636, %v635
    %v768 = vpack.c.b16 %v638, %v637
    %v769 = vpack.c.b16 %v640, %v639
    %v770 = vpack.c.b16 %v642, %v641
    %v771 = vpack.c.b16 %v644, %v643
    %v772 = vpack.c.b16 %v646, %v645
    %v773 = vpack.c.b16 %v648, %v647
    %v774 = vpack.c.b16 %v650, %v649
    %v775 = vpack.c.b16 %v652, %v651
    %v776 = vpack.c.b16 %v654, %v653
    %v777 = vpack.c.b16 %v656, %v655
    %v778 = vpack.c.b16 %v658, %v657
    %v779 = vpack.c.b16 %v660, %v659
    %v780 = vpack.c.b16 %v662, %v661
    %v781 = vpack.c.b16 %v664, %v663
    %v782 = vpack.c.b16 %v666, %v665
    %v783 = vpack.c.b16 %v668, %v667
    %v784 = vpack.c.b16 %v670, %v669
    %v785 = vpack.c.b16 %v672, %v671
    %v786 = vpack.c.b16 %v674, %v673
    %v787 = vpack.c.b16 %v676, %v675
    %v788 = vpack.c.b16 %v678, %v677
    %v789 = vpack.c.b16 %v680, %v679
    %v790 = vpack.c.b16 %v682, %v681
    %v791 = vpack.c.b16 %v684, %v683
    %v792 = vpack.c.b16 %v686, %v685
    %v793 = vpack.c.b16 %v688, %v687
    %v794 = vpack.c.b16 %v690, %v689
    %v795 = vpack.c.b16 %v692, %v691
    %v796 = vpack.c.b16 %v694, %v693
    %v797 = vpack.c.b16 %v696, %v695
    %v798 = vpack.c.b16 %v698, %v697
    %v799 = vpack.c.b16 %v700, %v699
    %v800 = vpack.c.b16 %v702, %v701
    %v801 = vpack.c.b16 %v704, %v703
    %v802 = vpack.c.b16 %v706, %v705
    %v803 = vpack.c.b16 %v708, %v707
    %v804 = vpack.c.b16 %v710, %v709
    %v805 = vpack.c.b16 %v712, %v711
    %v806 = vpack.c.b16 %v714, %v713
    %v807 = vpack.c.b16 %v716, %v715
    %v808 = vpack.c.b16 %v718, %v717
    %v809 = vpack.c.b16 %v720, %v719
    %v810 = vpack.c.b16 %v722, %v721
    %v811 = vpack.c.b16 %v724, %v723
    %v812 = vpack.c.b16 %v726, %v725
    %v813 = vpack.c.b16 %v728, %v727
    %v814 = vpack.c.b16 %v730, %v729
    %v815 = vpack.c.b16 %v732, %v731
    %v816 = vpack.c.b16 %v734, %v733
    %v817 = vpack.c.b16 %v736, %v735
    %v818 = vpack.c.b16 %v738, %v737
    %899 = vmatpush.bf16.msra.mxu0 %v746
    %900 = vmatpush.bf16.msra.mxu0 %v745
    %901 = vmatpush.bf16.msra.mxu0 %v744
    %902 = vmatpush.bf16.msra.mxu0 %v743
    %903 = vmatpush.bf16.msra.mxu0 %v742
    %904 = vmatpush.bf16.msra.mxu0 %v741
    %905 = vmatpush.bf16.msra.mxu0 %v740
    %906 = vmatpush.bf16.msra.mxu0 %v739
    %907 = vmatmul.bf16.gmra.mxu0 %v399
    %v908 = vpop.f32.mrf.mxu0
    %v909 = vadd.f32 0.0, %v908
    %v910 = vpop.f32.mrf.mxu0
    %v911 = vadd.f32 0.0, %v910
    %912 = vdwg.mxu0
    %913 = vmatpush.bf16.msra.mxu0 %v754
    %914 = vmatpush.bf16.msra.mxu0 %v753
    %915 = vmatpush.bf16.msra.mxu0 %v752
    %916 = vmatpush.bf16.msra.mxu0 %v751
    %917 = vmatpush.bf16.msra.mxu0 %v750
    %918 = vmatpush.bf16.msra.mxu0 %v749
    %919 = vmatpush.bf16.msra.mxu0 %v748
    %920 = vmatpush.bf16.msra.mxu0 %v747
    %921 = vmatmul.bf16.gmra.mxu0 %v400
    %v922 = vpop.f32.mrf.mxu0
    %v923 = vadd.f32 %v909, %v922
    %v924 = vpop.f32.mrf.mxu0
    %v925 = vadd.f32 %v911, %v924
    %926 = vdwg.mxu0
    %927 = vmatpush.bf16.msra.mxu0 %v762
    %928 = vmatpush.bf16.msra.mxu0 %v761
    %929 = vmatpush.bf16.msra.mxu0 %v760
    %930 = vmatpush.bf16.msra.mxu0 %v759
    %931 = vmatpush.bf16.msra.mxu0 %v758
    %932 = vmatpush.bf16.msra.mxu0 %v757
    %933 = vmatpush.bf16.msra.mxu0 %v756
    %934 = vmatpush.bf16.msra.mxu0 %v755
    %935 = vmatmul.bf16.gmra.mxu0 %v401
    %v936 = vpop.f32.mrf.mxu0
    %v937 = vadd.f32 %v923, %v936
    %v938 = vpop.f32.mrf.mxu0
    %v939 = vadd.f32 %v925, %v938
    %940 = vdwg.mxu0
    %941 = vmatpush.bf16.msra.mxu0 %v770
    %942 = vmatpush.bf16.msra.mxu0 %v769
    %943 = vmatpush.bf16.msra.mxu0 %v768
    %944 = vmatpush.bf16.msra.mxu0 %v767
    %945 = vmatpush.bf16.msra.mxu0 %v766
    %946 = vmatpush.bf16.msra.mxu0 %v765
    %947 = vmatpush.bf16.msra.mxu0 %v764
    %948 = vmatpush.bf16.msra.mxu0 %v763
    %949 = vmatmul.bf16.gmra.mxu0 %v402
    %v950 = vpop.f32.mrf.mxu0
    %v951 = vadd.f32 %v937, %v950
    %v952 = vpop.f32.mrf.mxu0
    %v953 = vadd.f32 %v939, %v952
    %954 = vdwg.mxu0
    %955 = vmatpush.bf16.msra.mxu0 %v778
    %956 = vmatpush.bf16.msra.mxu0 %v777
    %957 = vmatpush.bf16.msra.mxu0 %v776
    %958 = vmatpush.bf16.msra.mxu0 %v775
    %959 = vmatpush.bf16.msra.mxu0 %v774
    %960 = vmatpush.bf16.msra.mxu0 %v773
    %961 = vmatpush.bf16.msra.mxu0 %v772
    %962 = vmatpush.bf16.msra.mxu0 %v771
    %963 = vmatmul.bf16.gmra.mxu0 %v403
    %v964 = vpop.f32.mrf.mxu0
    %v965 = vadd.f32 %v951, %v964
    %v966 = vpop.f32.mrf.mxu0
    %v967 = vadd.f32 %v953, %v966
    %968 = vdwg.mxu0
    %969 = vmatpush.bf16.msra.mxu0 %v786
    %970 = vmatpush.bf16.msra.mxu0 %v785
    %971 = vmatpush.bf16.msra.mxu0 %v784
    %972 = vmatpush.bf16.msra.mxu0 %v783
    %973 = vmatpush.bf16.msra.mxu0 %v782
    %974 = vmatpush.bf16.msra.mxu0 %v781
    %975 = vmatpush.bf16.msra.mxu0 %v780
    %976 = vmatpush.bf16.msra.mxu0 %v779
    %977 = vmatmul.bf16.gmra.mxu0 %v404
    %v978 = vpop.f32.mrf.mxu0
    %v979 = vadd.f32 %v965, %v978
    %v980 = vpop.f32.mrf.mxu0
    %v981 = vadd.f32 %v967, %v980
    %982 = vdwg.mxu0
    %983 = vmatpush.bf16.msra.mxu0 %v794
    %984 = vmatpush.bf16.msra.mxu0 %v793
    %985 = vmatpush.bf16.msra.mxu0 %v792
    %986 = vmatpush.bf16.msra.mxu0 %v791
    %987 = vmatpush.bf16.msra.mxu0 %v790
    %988 = vmatpush.bf16.msra.mxu0 %v789
    %989 = vmatpush.bf16.msra.mxu0 %v788
    %990 = vmatpush.bf16.msra.mxu0 %v787
    %991 = vmatmul.bf16.gmra.mxu0 %v405
    %v992 = vpop.f32.mrf.mxu0
    %v993 = vadd.f32 %v979, %v992
    %v994 = vpop.f32.mrf.mxu0
    %v995 = vadd.f32 %v981, %v994
    %996 = vdwg.mxu0
    %997 = vmatpush.bf16.msra.mxu0 %v802
    %998 = vmatpush.bf16.msra.mxu0 %v801
    %999 = vmatpush.bf16.msra.mxu0 %v800
    %1000 = vmatpush.bf16.msra.mxu0 %v799
    %1001 = vmatpush.bf16.msra.mxu0 %v798
    %1002 = vmatpush.bf16.msra.mxu0 %v797
    %1003 = vmatpush.bf16.msra.mxu0 %v796
    %1004 = vmatpush.bf16.msra.mxu0 %v795
    %1005 = vmatmul.bf16.gmra.mxu0 %v406
    %v1006 = vpop.f32.mrf.mxu0
    %v1007 = vadd.f32 %v993, %v1006
    %v1008 = vpop.f32.mrf.mxu0
    %v1009 = vadd.f32 %v995, %v1008
    %1010 = vdwg.mxu0
    %1011 = vmatpush.bf16.msra.mxu0 %v810
    %1012 = vmatpush.bf16.msra.mxu0 %v809
    %1013 = vmatpush.bf16.msra.mxu0 %v808
    %1014 = vmatpush.bf16.msra.mxu0 %v807
    %1015 = vmatpush.bf16.msra.mxu0 %v806
    %1016 = vmatpush.bf16.msra.mxu0 %v805
    %1017 = vmatpush.bf16.msra.mxu0 %v804
    %1018 = vmatpush.bf16.msra.mxu0 %v803
    %1019 = vmatmul.bf16.gmra.mxu0 %v407
    %v1020 = vpop.f32.mrf.mxu0
    %v1021 = vadd.f32 %v1007, %v1020
    %v1022 = vpop.f32.mrf.mxu0
    %v1023 = vadd.f32 %v1009, %v1022
    %1024 = vdwg.mxu0
    %1025 = vmatpush.bf16.msra.mxu0 %v818
    %1026 = vmatpush.bf16.msra.mxu0 %v817
    %1027 = vmatpush.bf16.msra.mxu0 %v816
    %1028 = vmatpush.bf16.msra.mxu0 %v815
    %1029 = vmatpush.bf16.msra.mxu0 %v814
    %1030 = vmatpush.bf16.msra.mxu0 %v813
    %1031 = vmatpush.bf16.msra.mxu0 %v812
    %1032 = vmatpush.bf16.msra.mxu0 %v811
    %1033 = vmatmul.bf16.gmra.mxu0 %v408
    %v1034 = vpop.f32.mrf.mxu0
    %v1035 = vadd.f32 %v1021, %v1034
    %v1036 = vpop.f32.mrf.mxu0
    %v1037 = vadd.f32 %v1023, %v1036
    %1038 = vdwg.mxu0
    %v1055 = vunpack.c.l.b16 %v183
    %v1056 = vunpack.c.l.b16 %v184
    %v1057 = vunpack.c.l.b16 %v185
    %v1058 = vunpack.c.l.b16 %v186
    %v1059 = vunpack.c.l.b16 %v187
    %v1060 = vunpack.c.l.b16 %v188
    %v1061 = vunpack.c.l.b16 %v189
    %v1062 = vunpack.c.l.b16 %v190
    %v1063 = vunpack.c.l.b16 %v191
    %v1064 = vunpack.c.l.b16 %v192
    %v1065 = vunpack.c.l.b16 %v193
    %v1066 = vunpack.c.l.b16 %v194
    %v1067 = vunpack.c.l.b16 %v195
    %v1068 = vunpack.c.l.b16 %v196
    %v1069 = vunpack.c.l.b16 %v197
    %v1070 = vunpack.c.l.b16 %v198
    %v1071 = vpack.c.b16 %v1056, %v1055
    %v1072 = vpack.c.b16 %v1058, %v1057
    %v1073 = vpack.c.b16 %v1060, %v1059
    %v1074 = vpack.c.b16 %v1062, %v1061
    %v1075 = vpack.c.b16 %v1064, %v1063
    %v1076 = vpack.c.b16 %v1066, %v1065
    %v1077 = vpack.c.b16 %v1068, %v1067
    %v1078 = vpack.c.b16 %v1070, %v1069
    %1087 = vmatpush.bf16.msra.mxu0 %v1078
    %1088 = vmatpush.bf16.msra.mxu0 %v1077
    %1089 = vmatpush.bf16.msra.mxu0 %v1076
    %1090 = vmatpush.bf16.msra.mxu0 %v1075
    %1091 = vmatpush.bf16.msra.mxu0 %v1074
    %1092 = vmatpush.bf16.msra.mxu0 %v1073
    %1093 = vmatpush.bf16.msra.mxu0 %v1072
    %1094 = vmatpush.bf16.msra.mxu0 %v1071
    %1095 = vmatmul.bf16.gmra.mxu0 %v182
    %v1096 = vpop.f32.mrf.mxu0
    %v1097 = vadd.f32 %v1035, %v1096
    %v1098 = vpop.f32.mrf.mxu0
    %v1099 = vadd.f32 %v1037, %v1098
    %1100 = vdwg.mxu0
    %v1101 = vld [vmem:[%s10] sm:$0x1]
    %v1103 = vperm.slane %v1101, 0
    %v1105 = vadd.f32 %v1097, %v1103
    %v1106 = vadd.f32 %v1099, %v1103
    %v1107 = vmax.f32 %v1105, 0.0
    %v1108 = vmax.f32 %v1106, 0.0
    %1111 = vrot.lane.b32.xlu0 %v180, 64
    %v1112 = vpop.permute.xlu0 %1111
    %1113 = vrot.lane.b32.xlu0 %v181, 64
    %v1114 = vpop.permute.xlu0 %1113
    %v1117 = vsel %vm124, %v1107, %v1112
    %v1118 = vsel %vm124, %v1108, %v1114
    %v1119 = vld [vmem:[%s11] sm:$0xff]
    %v1120 = vld [vmem:[%s11 + $0x8] sm:$0xff]
    %v1121 = vld [vmem:[%s11 + $0x10] sm:$0xff]
    %v1122 = vld [vmem:[%s11 + $0x18] sm:$0xff]
    %v1123 = vld [vmem:[%s11 + $0x20] sm:$0xff]
    %v1124 = vld [vmem:[%s11 + $0x28] sm:$0xff]
    %v1125 = vld [vmem:[%s11 + $0x30] sm:$0xff]
    %v1126 = vld [vmem:[%s11 + $0x38] sm:$0xff]
    %v1127 = vld [vmem:[%s11 + $0x40] sm:$0xff]
    %v1128 = vld [vmem:[%s11 + $0x48] sm:$0xff]
    %v1129 = vld [vmem:[%s11 + $0x50] sm:$0xff]
    %v1130 = vld [vmem:[%s11 + $0x58] sm:$0xff]
    %v1131 = vld [vmem:[%s11 + $0x60] sm:$0xff]
    %v1132 = vld [vmem:[%s11 + $0x68] sm:$0xff]
    %v1133 = vld [vmem:[%s11 + $0x70] sm:$0xff]
    %v1134 = vld [vmem:[%s11 + $0x78] sm:$0xff]
    %v1135 = vld [vmem:[%s12] sm:$0x1]
    %v1137 = vperm.slane %v1135, 0
    %1139 = vmatpush.msra.mxu0 %v1134
    %1140 = vmatpush.msra.mxu0 %v1133
    %1141 = vmatpush.msra.mxu0 %v1132
    %1142 = vmatpush.msra.mxu0 %v1131
    %1143 = vmatpush.msra.mxu0 %v1130
    %1144 = vmatpush.msra.mxu0 %v1129
    %1145 = vmatpush.msra.mxu0 %v1128
    %1146 = vmatpush.msra.mxu0 %v1127
    %1147 = vmatpush.msra.mxu0 %v1126
    %1148 = vmatpush.msra.mxu0 %v1125
    %1149 = vmatpush.msra.mxu0 %v1124
    %1150 = vmatpush.msra.mxu0 %v1123
    %1151 = vmatpush.msra.mxu0 %v1122
    %1152 = vmatpush.msra.mxu0 %v1121
    %1153 = vmatpush.msra.mxu0 %v1120
    %1154 = vmatpush.msra.mxu0 %v1119
    %1155 = vmatmul.f32.gmra.mxu0 %v1117
    %v1156 = vpop.f32.mrf.mxu0
    %v1157 = vadd.f32 %v1137, %v1156
    %1158 = vmatmul.f32.gmra.mxu0 %v1118
    %v1159 = vpop.f32.mrf.mxu0
    %v1160 = vadd.f32 %v1137, %v1159
    %1161 = vdwg.mxu0
    %1162 = vst [vmem:[#allocation2] sm:$0xff] %v1157
    %1163 = vst [vmem:[#allocation2 + $0x8] sm:$0xff] %v1160
    // Predicated region
    $region54: #{tpu_custom_call.1} parent=1 // pred_check
      _
    $region55: #{tpu_custom_call.1} parent=1 // pred_check_branch
      %1165 = sbr.rel (0) target = $region57
    $region56: #{tpu_custom_call.1} parent=1 // pred_region
      %1167 = vsyncadd [#allocation3], 0
      %s1168 = sshll.u32 [#allocation2], 4
      %s1169 = int_to_ptr.vmem [resolvable:$true] %s1168
      %s1170 = sshll.u32 %s13, 4
      %s1171 = int_to_ptr.hbm [resolvable:$true] %s1170
      %1176 = dma.vmem_to_hbm [thread:$0]  %s1169, 256, %s1171, [#allocation3], 128, 128, 8
    $region57: #{tpu_custom_call.1} parent=1 // pred_fallthru
      _
    // Predicated region
    $region58: #{tpu_custom_call.1} parent=1 // pred_check
      _
    $region59: #{tpu_custom_call.1} parent=1 // pred_check_branch
      %1178 = sbr.rel (0) target = $region61
    $region60: #{tpu_custom_call.1} parent=1 // pred_region
      %1180 = dma.done [#allocation3], 256
    $region61: #{tpu_custom_call.1} parent=1 // pred_fallthru
      _
    %1181 = vsyncpa [#allocation3], 1

</llo_original>
